<compile_context>
chip_gen: v6e
topology: v6e:2x2x1
jax: 0.10.0
libtpu: 0.0.40
codegen_flags: <defaults>
</compile_context>

<pallas_src>
import functools

import jax
import jax.numpy as jnp
from jax.experimental import pallas as pl
from jax.experimental.pallas import tpu as pltpu


def _averager_kernel(x_ref, snap_ref, out_ref, snap_out_ref, *,
                     update_size, batch_size, num_updates):
    """Kernel body (one channel block per grid step).

    x_ref        : (B, cb, keep)  trailing update window (keep = N*U)
    snap_ref     : (cb, S)        incoming snapshot, S = (B+N-1)*U
    out_ref      : (cb, B*U)      averaged output block
    snap_out_ref : (cb, S)        new snapshot (carried tail + zero pad)
    """
    U = update_size
    B = batch_size
    N = num_updates
    bu = B * U
    inv_n = jnp.float32(1.0 / N)

    # One load of the update window (cast + prescale once) and one of the
    # snapshot; all shifting / summing happens on values so the only stores
    # are the two full-width block stores at the end.
    x = x_ref[...].astype(jnp.float32) * inv_n            # (B, cb, N*U)
    snap = snap_ref[...].astype(jnp.float32)              # (cb, S)

    # Summed timeline, built segment by segment.  Segment j covers timeline
    # [j*U, (j+1)*U) and receives update window b for b in [j-N+1, j] ∩ [0, B)
    # at in-window offset (j-b)*U.  B, N are small & static -> unrolled.
    n_seg = B + N - 1
    segs = []
    for j in range(n_seg):
        seg = snap[:, j * U:(j + 1) * U]
        for b in range(max(0, j - N + 1), min(B - 1, j) + 1):
            t0 = (j - b) * U
            seg = seg + x[b, :, t0:t0 + U]
        segs.append(seg)

    # Exactly one full-width store per output ref.
    out_ref[...] = jnp.concatenate(segs[:B], axis=-1).astype(out_ref.dtype)
    if N > 1:
        cb = snap_out_ref.shape[0]
        tail = segs[B:] + [jnp.zeros((cb, bu), jnp.float32)]
        snap_out_ref[...] = jnp.concatenate(tail, axis=-1).astype(
            snap_out_ref.dtype)
    else:
        # num_updates == 1: the whole timeline is the output, snapshot resets.
        snap_out_ref[...] = jnp.zeros_like(snap_out_ref)


def _vmem_capacity_bytes():
    """Physical VMEM of the current chip (128 MiB v5e/v6e, 64 MiB v7x)."""
    try:
        return int(pltpu.get_tpu_info().vmem_capacity_bytes)
    except Exception:
        return 64 << 20   # conservative v7x-class fallback


def _per_channel_vmem_bytes(batch_size, keep, s_len, bu,
                            upd_bytes, snap_bytes, out_bytes):
    """Per-channel VMEM footprint of one grid step: double-buffered streamed
    blocks (real dtypes) plus the in-kernel f32 temporaries."""
    streamed = 2 * (batch_size * keep * upd_bytes     # update window
                    + s_len * snap_bytes              # snapshot in
                    + bu * out_bytes                  # output block
                    + s_len * out_bytes)              # new-snapshot block
    temps = 4 * (batch_size * keep + 2 * s_len)       # f32 x + timeline values
    return streamed + temps


def _pick_channel_block(num_channels, per_channel_bytes, budget_bytes):
    """Largest multiple-of-8 divisor of C whose per-step footprint fits the
    budget, preferring a block that leaves >= 2 grid steps so the "parallel"
    channel axis can be split across both v7x TensorCores (the extra grid
    step costs ~0.35us on 1-TC chips -- negligible)."""
    candidates = [c for c in range(8, num_channels + 1, 8)
                  if num_channels % c == 0]
    if not candidates:
        return num_channels          # full-array channel block is always legal
    fitting = [c for c in candidates if c * per_channel_bytes <= budget_bytes]
    if not fitting:
        return candidates[0]         # smallest legal block
    multi_step = [c for c in fitting if num_channels // c >= 2]
    return max(multi_step) if multi_step else max(fitting)


def online_averager_forward(update, snapshot, *, update_size, batch_size,
                            num_updates, num_channels, channel_block=None,
                            alias_snapshot=False, channel_budget_bytes=None,
                            require_lane_aligned=False):
    """Pallas implementation of OnlineAverager.forward (channelled path)."""
    keep = num_updates * update_size
    bu = batch_size * update_size
    s_len = (batch_size + num_updates - 1) * update_size

    B, C, T = update.shape
    assert (B, C) == (batch_size, num_channels)
    assert T >= keep, "update time length must be >= num_updates * update_size"
    assert snapshot.shape == (num_channels, s_len)
    if require_lane_aligned:
        assert update_size % 128 == 0, (
            "production shapes should use update_size % 128 == 0 for "
            "lane-dense loads/stores")

    out_dtype = jnp.promote_types(update.dtype, snapshot.dtype)

    # --- trailing update window: fetch it via the BlockSpec when aligned -----
    toff = T - keep
    if toff == 0:
        time_block_index = 0                      # full time dim is the window
    elif toff % keep == 0 and keep % 128 == 0:
        time_block_index = toff // keep           # block-aligned trailing window
    else:
        # TODO(synk): unaligned trailing window -> one host-side slice copy.
        # Production should pick T with (T-keep) % keep == 0 (and keep % 128
        # == 0) so this copy disappears.
        update = update[:, :, toff:]
        T = keep
        time_block_index = 0

    # --- VMEM budgeting / channel tiling --------------------------------------
    vmem_cap = _vmem_capacity_bytes()
    budget = channel_budget_bytes
    if budget is None:
        # ~1/3 of physical VMEM: ~42 MiB on v5e/v6e (128 MiB), ~21 MiB on v7x.
        budget = max(8 << 20, min(vmem_cap // 3, 48 << 20))
    vmem_limit = int(min(vmem_cap * 3 // 4, 96 << 20))

    per_c = _per_channel_vmem_bytes(
        batch_size, keep, s_len, bu,
        jnp.dtype(update.dtype).itemsize,
        jnp.dtype(snapshot.dtype).itemsize,
        jnp.dtype(out_dtype).itemsize)

    c_eff = C
    if channel_block is None:
        if C % 8 != 0 and C > 8 and C * per_c > budget:
            # A full-C block of a large non-multiple-of-8 C would blow the
            # budget (critical on v7x's 64 MiB): pad channels to a multiple of
            # 8 so we can tile, and slice the outputs back afterwards.
            c_eff = ((C + 7) // 8) * 8
            update = jnp.pad(update, ((0, 0), (0, c_eff - C), (0, 0)))
            snapshot = jnp.pad(snapshot, ((0, c_eff - C), (0, 0)))
        cb = _pick_channel_block(c_eff, per_c, budget)
    else:
        cb = channel_block
    assert c_eff % cb == 0 and (cb == c_eff or cb % 8 == 0)

    kernel = functools.partial(
        _averager_kernel,
        update_size=update_size,
        batch_size=batch_size,
        num_updates=num_updates,
    )

    call_kwargs = {}
    if alias_snapshot and snapshot.dtype == out_dtype:
        # Streaming deployment: new_snapshot reuses the snapshot buffer.
        call_kwargs["input_output_aliases"] = {1: 1}

    out, new_snap = pl.pallas_call(
        kernel,
        grid=(c_eff // cb,),
        in_specs=[
            pl.BlockSpec((batch_size, cb, keep),
                         lambda c: (0, c, time_block_index)),
            pl.BlockSpec((cb, s_len), lambda c: (c, 0)),
        ],
        out_specs=(
            pl.BlockSpec((cb, bu), lambda c: (c, 0)),
            pl.BlockSpec((cb, s_len), lambda c: (c, 0)),
        ),
        out_shape=(
            jax.ShapeDtypeStruct((c_eff, bu), out_dtype),
            jax.ShapeDtypeStruct((c_eff, s_len), out_dtype),
        ),
        compiler_params=pltpu.CompilerParams(
            dimension_semantics=("parallel",),
            vmem_limit_bytes=vmem_limit),
        **call_kwargs,
    )(update, snapshot)

    if c_eff != C:
        out = out[:C]
        new_snap = new_snap[:C]
    return out[None], new_snap   # matches torch: (output[None], new_snapshot)


def _reference_forward(update, snapshot, *, update_size, batch_size,
                       num_updates, num_channels):
    """Pure-JAX faithful transliteration of the PyTorch forward (including the
    weights division), used to verify the algebraic simplification."""
    U, B, N, C = update_size, batch_size, num_updates, num_channels
    keep = N * U
    s_len = (B + N - 1) * U
    bu = B * U
    # `weights` buffer from __init__: full-timeline window-overlap counts.
    s = jnp.arange(s_len)
    i = jnp.arange(B)
    mask = ((s[None, :] >= i[:, None] * U)
            & (s[None, :] < i[:, None] * U + keep))
    w_full = mask.sum(axis=0).astype(jnp.float32)                  # (S,)
    x = update[:, :, -keep:].astype(jnp.float32) / N               # (B, C, keep)
    snap = snapshot.astype(jnp.float32)
    acc = jnp.zeros((C, s_len), jnp.float32)
    for b in range(B):
        lo = b * U
        win = snap[:, lo:lo + keep] / w_full[lo:lo + keep] + x[b]
        acc = acc.at[:, lo:lo + keep].add(win)
    output = acc[:, :bu]
    if N == 1:
        new_snap = jnp.zeros_like(acc)
    else:
        new_snap = jnp.concatenate(
            [acc[:, bu:], jnp.zeros((C, bu), jnp.float32)], axis=-1)
    return output[None], new_snap


if __name__ == "__main__":
    # (a) block-aligned trailing window (keep=128, extra=128) + 2-step channel
    #     grid + snapshot aliasing; (b) num_updates==1 reset path with a
    #     non-multiple-of-8 channel count; (c) bf16 update + unaligned extra
    #     time (host-slice fallback); (d) forced channel padding path.
    configs = [
        dict(update_size=32, batch_size=2, num_updates=4, num_channels=16,
             extra_time=128, channel_block=8, update_dtype=jnp.float32,
             snapshot_dtype=jnp.float32, alias_snapshot=True,
             channel_budget_bytes=None),
        dict(update_size=16, batch_size=3, num_updates=1, num_channels=4,
             extra_time=0, channel_block=None, update_dtype=jnp.float32,
             snapshot_dtype=jnp.float32, alias_snapshot=False,
             channel_budget_bytes=None),
        dict(update_size=16, batch_size=2, num_updates=3, num_channels=8,
             extra_time=16, channel_block=None, update_dtype=jnp.bfloat16,
             snapshot_dtype=jnp.float32, alias_snapshot=False,
             channel_budget_bytes=None),
        dict(update_size=16, batch_size=2, num_updates=4, num_channels=12,
             extra_time=0, channel_block=None, update_dtype=jnp.float32,
             snapshot_dtype=jnp.float32, alias_snapshot=False,
             channel_budget_bytes=16 * 1024),
    ]

    key = jax.random.PRNGKey(0)
    for cfg in configs:
        U, B, N, C = (cfg["update_size"], cfg["batch_size"],
                      cfg["num_updates"], cfg["num_channels"])
        keep = N * U
        s_len = (B + N - 1) * U
        bu = B * U
        t_len = keep + cfg["extra_time"]

        key, k1, k2 = jax.random.split(key, 3)
        update = jax.random.normal(k1, (B, C, t_len), jnp.float32).astype(
            cfg["update_dtype"])
        snapshot = jax.random.normal(k2, (C, s_len), jnp.float32).astype(
            cfg["snapshot_dtype"])

        # Reference first (the snapshot buffer may be aliased by the kernel).
        ref_out, ref_snap = _reference_forward(
            update, snapshot,
            update_size=U, batch_size=B, num_updates=N, num_channels=C)

        out, new_snap = online_averager_forward(
            update, snapshot,
            update_size=U, batch_size=B, num_updates=N, num_channels=C,
            channel_block=cfg["channel_block"],
            alias_snapshot=cfg["alias_snapshot"],
            channel_budget_bytes=cfg["channel_budget_bytes"])
        out = jax.block_until_ready(out)
        new_snap = jax.block_until_ready(new_snap)

        assert out.shape == (1, C, bu)
        assert new_snap.shape == (C, s_len)
        assert jnp.allclose(out.astype(jnp.float32), ref_out,
                            atol=1e-5, rtol=1e-5)
        assert jnp.allclose(new_snap.astype(jnp.float32), ref_snap,
                            atol=1e-5, rtol=1e-5)

    # TODO(synk): num_channels=None variant (1-D snapshot) is not wired up;
    # only the channelled path is implemented in the kernel.
    print("KERNEL_OK")
</pallas_src>

<mosaic_0001>
module attributes {stable_mosaic.version = 11 : i64} {
  func.func @_averager_kernel(%arg0: i32, %arg1: memref<2x8x128xf32, #tpu.memory_space<vmem>>, %arg2: memref<8x160xf32, #tpu.memory_space<vmem>>, %arg3: memref<8x64xf32, #tpu.memory_space<vmem>>, %arg4: memref<8x160xf32, #tpu.memory_space<vmem>>) attributes {dimension_semantics = [#tpu.dimension_semantics<parallel>], iteration_bounds = array<i64: 2>, scalar_prefetch = 0 : i64, scratch_operands = 0 : i64, tpu.core_type = #tpu.core_type<tc>, window_params = [{transform_indices = @transform_0, window_bounds = array<i64: 2, 8, 128>}, {transform_indices = @transform_1, window_bounds = array<i64: 8, 160>}, {transform_indices = @transform_2, window_bounds = array<i64: 8, 64>}, {transform_indices = @transform_3, window_bounds = array<i64: 8, 160>}]} {
    %c0 = arith.constant 0 : index
    %c0_0 = arith.constant 0 : index
    %c0_1 = arith.constant 0 : index
    %0 = vector.load %arg1[%c0, %c0_0, %c0_1] : memref<2x8x128xf32, #tpu.memory_space<vmem>>, vector<2x8x128xf32>
    %cst = arith.constant 2.500000e-01 : f32
    %1 = vector.broadcast %cst : f32 to vector<2x8x128xf32>
    %2 = arith.mulf %0, %1 : vector<2x8x128xf32>
    %c0_2 = arith.constant 0 : index
    %c0_3 = arith.constant 0 : index
    %3 = vector.load %arg2[%c0_2, %c0_3] : memref<8x160xf32, #tpu.memory_space<vmem>>, vector<8x160xf32>
    %4 = vector.extract_strided_slice %3 {offsets = [0, 0], sizes = [8, 32], strides = [1, 1]} : vector<8x160xf32> to vector<8x32xf32>
    %5 = vector.extract_strided_slice %2 {offsets = [0, 0, 0], sizes = [1, 8, 32], strides = [1, 1, 1]} : vector<2x8x128xf32> to vector<1x8x32xf32>
    %6 = vector.shape_cast %5 : vector<1x8x32xf32> to vector<8x32xf32>
    %7 = arith.addf %4, %6 : vector<8x32xf32>
    %8 = vector.extract_strided_slice %3 {offsets = [0, 32], sizes = [8, 32], strides = [1, 1]} : vector<8x160xf32> to vector<8x32xf32>
    %9 = vector.extract_strided_slice %2 {offsets = [0, 0, 32], sizes = [1, 8, 32], strides = [1, 1, 1]} : vector<2x8x128xf32> to vector<1x8x32xf32>
    %10 = vector.shape_cast %9 : vector<1x8x32xf32> to vector<8x32xf32>
    %11 = arith.addf %8, %10 : vector<8x32xf32>
    %12 = vector.extract_strided_slice %2 {offsets = [1, 0, 0], sizes = [1, 8, 32], strides = [1, 1, 1]} : vector<2x8x128xf32> to vector<1x8x32xf32>
    %13 = vector.shape_cast %12 : vector<1x8x32xf32> to vector<8x32xf32>
    %14 = arith.addf %11, %13 : vector<8x32xf32>
    %15 = vector.extract_strided_slice %3 {offsets = [0, 64], sizes = [8, 32], strides = [1, 1]} : vector<8x160xf32> to vector<8x32xf32>
    %16 = vector.extract_strided_slice %2 {offsets = [0, 0, 64], sizes = [1, 8, 32], strides = [1, 1, 1]} : vector<2x8x128xf32> to vector<1x8x32xf32>
    %17 = vector.shape_cast %16 : vector<1x8x32xf32> to vector<8x32xf32>
    %18 = arith.addf %15, %17 : vector<8x32xf32>
    %19 = vector.extract_strided_slice %2 {offsets = [1, 0, 32], sizes = [1, 8, 32], strides = [1, 1, 1]} : vector<2x8x128xf32> to vector<1x8x32xf32>
    %20 = vector.shape_cast %19 : vector<1x8x32xf32> to vector<8x32xf32>
    %21 = arith.addf %18, %20 : vector<8x32xf32>
    %22 = vector.extract_strided_slice %3 {offsets = [0, 96], sizes = [8, 32], strides = [1, 1]} : vector<8x160xf32> to vector<8x32xf32>
    %23 = vector.extract_strided_slice %2 {offsets = [0, 0, 96], sizes = [1, 8, 32], strides = [1, 1, 1]} : vector<2x8x128xf32> to vector<1x8x32xf32>
    %24 = vector.shape_cast %23 : vector<1x8x32xf32> to vector<8x32xf32>
    %25 = arith.addf %22, %24 : vector<8x32xf32>
    %26 = vector.extract_strided_slice %2 {offsets = [1, 0, 64], sizes = [1, 8, 32], strides = [1, 1, 1]} : vector<2x8x128xf32> to vector<1x8x32xf32>
    %27 = vector.shape_cast %26 : vector<1x8x32xf32> to vector<8x32xf32>
    %28 = arith.addf %25, %27 : vector<8x32xf32>
    %29 = vector.extract_strided_slice %3 {offsets = [0, 128], sizes = [8, 32], strides = [1, 1]} : vector<8x160xf32> to vector<8x32xf32>
    %30 = vector.extract_strided_slice %2 {offsets = [1, 0, 96], sizes = [1, 8, 32], strides = [1, 1, 1]} : vector<2x8x128xf32> to vector<1x8x32xf32>
    %31 = vector.shape_cast %30 : vector<1x8x32xf32> to vector<8x32xf32>
    %32 = arith.addf %29, %31 : vector<8x32xf32>
    %33 = tpu.concatenate %7, %14 in 1 : vector<8x32xf32>, vector<8x32xf32> -> vector<8x64xf32>
    %c0_4 = arith.constant 0 : index
    %c0_5 = arith.constant 0 : index
    %34 = vector.load %arg3[%c0_4, %c0_5] : memref<8x64xf32, #tpu.memory_space<vmem>>, vector<8x64xf32>
    tpu.vector_store %arg3[%c0_4, %c0_5], %33 {strides = array<i32>} : memref<8x64xf32, #tpu.memory_space<vmem>>, vector<8x64xf32>,
    %cst_6 = arith.constant 0.000000e+00 : f32
    %35 = vector.broadcast %cst_6 : f32 to vector<8x64xf32>
    %36 = tpu.concatenate %21, %28, %32, %35 in 1 : vector<8x32xf32>, vector<8x32xf32>, vector<8x32xf32>, vector<8x64xf32> -> vector<8x160xf32>
    %c0_7 = arith.constant 0 : index
    %c0_8 = arith.constant 0 : index
    %37 = vector.load %arg4[%c0_7, %c0_8] : memref<8x160xf32, #tpu.memory_space<vmem>>, vector<8x160xf32>
    tpu.vector_store %arg4[%c0_7, %c0_8], %36 {strides = array<i32>} : memref<8x160xf32, #tpu.memory_space<vmem>>, vector<8x160xf32>,
    return
  }
  func.func @transform_0(%arg0: i32) -> (i32, i32, i32) {
    %c0_i32 = arith.constant 0 : i32
    %c1_i32 = arith.constant 1 : i32
    %c0_i32_0 = arith.constant 0 : i32
    return %c0_i32, %arg0, %c1_i32 : i32, i32, i32
  }
  func.func @transform_1(%arg0: i32) -> (i32, i32) {
    %c0_i32 = arith.constant 0 : i32
    %c0_i32_0 = arith.constant 0 : i32
    return %arg0, %c0_i32 : i32, i32
  }
  func.func @transform_2(%arg0: i32) -> (i32, i32) {
    %c0_i32 = arith.constant 0 : i32
    %c0_i32_0 = arith.constant 0 : i32
    return %arg0, %c0_i32 : i32, i32
  }
  func.func @transform_3(%arg0: i32) -> (i32, i32) {
    %c0_i32 = arith.constant 0 : i32
    %c0_i32_0 = arith.constant 0 : i32
    return %arg0, %c0_i32 : i32, i32
  }
}

</mosaic_0001>

<llo_original>
// kernel: tpu_custom_call.1
$region0: #{tpu_custom_call.1}
  #allocation0 [shape = 'u32[]', space=smem, size = 0x4, offset = 0x4, fixed_abs, tag = 'smem constant byte address 0x4 - core index']
  #allocation1 [shape = 'u32[144,128]{1,0:T(1,128)}', space=vmem, size = 0x12000, scoped, tag = 'internal scratch']
  %s0 = inlined_call_operand.vmem [shape: f32[2,16,256], index: 0, kind: input, shape index: {}]
  %s1 = inlined_call_operand.hbm [shape: f32[16,160], index: 1, kind: input, shape index: {}, may-alias: {1,3}]
  %s2 = inlined_call_operand.hbm [shape: f32[16,64], index: 2, kind: output, shape index: {0}]
  %s3 = inlined_call_operand.hbm [shape: f32[16,160], index: 3, kind: output, shape index: {1}, may-alias: {1,3}]
  %4 = xla_tuple %s2, %s3
  %s5 = sld [smem:[#allocation0]]
  $region91: #{tpu_custom_call.1} parent=0
    _
  %s7 = ssub.s32 1, %s5
  %s8 = scalar_select 0, %s7, %s5
  $region1: #{tpu_custom_call.1} parent=0
    #allocation2 [shape = 'u8[16384]{0}', space=vmem, size = 0x4000, scoped, tag = 'input window, operand 0']
    #allocation3 [shape = 'u8[16384]{0}', space=vmem, size = 0x4000, scoped, tag = 'input window, operand 1']
    #allocation4 [shape = 's32[2]{0}', space=sflag, size = 0x8, scoped, tag = 'scoped memory for tpu_custom_call.1']
    #allocation5 [shape = 's32[2]{0}', space=sflag, size = 0x8, scoped, tag = 'scoped memory for tpu_custom_call.1']
    #allocation6 [shape = 'u8[8192]{0}', space=vmem, size = 0x2000, scoped, tag = 'output window, operand 0']
    #allocation7 [shape = 'u8[16384]{0}', space=vmem, size = 0x4000, scoped, tag = 'output window, operand 1']
    #allocation8 [shape = 's32[2]{0}', space=sflag, size = 0x8, scoped, tag = 'scoped memory for tpu_custom_call.1']
    %9 = vsyncpa [#allocation4], 0
    %s10 = scalar_lea.sflag [#allocation4], 1
    %11 = vsyncpa %s10, 0
    %12 = vsyncpa [#allocation5], 0
    %s13 = scalar_lea.sflag [#allocation5], 1
    %14 = vsyncpa %s13, 0
    %15 = vsyncpa [#allocation8], 0
    %s16 = scalar_lea.sflag [#allocation8], 1
    %17 = vsyncpa %s16, 0
    loop: start=0, step=1, limit=4
    $region2: #{tpu_custom_call.1} parent=1 // loop_pre_header
      _
    $region3: #{tpu_custom_call.1} parent=1 // loop_header
      %s19 = sphi 0, %s23
      %p20 = scmp.ge.s32.totalorder %s19, 4
      %s29 = sphi 0, %s31
      %s32 = sphi 0, %s29
      %s33 = sphi 0, %s32
      %s49 = sphi 0, %s33
      %s55 = sphi 0, %s57
      %s58 = sphi 0, %s55
      %s59 = sphi 0, %s58
      %s75 = sphi 0, %s59
      %s81 = sphi 0, %s83
      %s84 = sphi 0, %s81
      %s85 = sphi 0, %s84
      %s101 = sphi 0, %s85
      %s107 = sphi 0, %s109
      %s110 = sphi 0, %s107
      %s111 = sphi 0, %s110
      %s127 = sphi 0, %s111
    $region4: #{tpu_custom_call.1} parent=1 // loop_header_branch
      %22 = sbr.rel (%p20) target = $region8
    $region5: #{tpu_custom_call.1} parent=1 // loop_body
      %s24 = ssub.s32 %s19, 1
      %s25 = ssub.s32 %s19, 2
      %s26 = sadd.s32 %s19, 1
      %s27 = ssub.s32 %s19, %s26
      %p28 = scmp.eq.s32.totalorder %s27, 0
      %s30 = sadd.s32 %s29, 1
      %s31 = scalar_select %p28, %s29, %s30
      %p34 = pneg %p28
      %p35 = scmp.eq.s32.totalorder %s19, 1
      %p36 = por %p34, %p35
      %p37 = scmp.ne.s32.totalorder %s29, %s32
      %p38 = scmp.eq.s32.totalorder %s19, 0
      %p39 = por %p37, %p38
      %p40 = scmp.ne.s32.totalorder %s29, %s32
      %p41 = scmp.eq.s32.totalorder %s24, 1
      %p42 = por %p40, %p41
      %p43 = scmp.ne.s32.totalorder %s32, %s33
      %p44 = scmp.eq.s32.totalorder %s24, 0
      %p45 = por %p43, %p44
      %p46 = scmp.ne.s32.totalorder %s32, %s33
      %p47 = scmp.eq.s32.totalorder %s25, 1
      %p48 = por %p46, %p47
      %p50 = scmp.ne.s32.totalorder %s33, %s49
      %p51 = scmp.eq.s32.totalorder %s25, 0
      %p52 = por %p50, %p51
      %s53 = ssub.s32 %s19, %s26
      %p54 = scmp.eq.s32.totalorder %s53, 0
      %s56 = sadd.s32 %s55, 1
      %s57 = scalar_select %p54, %s55, %s56
      %p60 = pneg %p54
      %p61 = scmp.eq.s32.totalorder %s19, 1
      %p62 = por %p60, %p61
      %p63 = scmp.ne.s32.totalorder %s55, %s58
      %p64 = scmp.eq.s32.totalorder %s19, 0
      %p65 = por %p63, %p64
      %p66 = scmp.ne.s32.totalorder %s55, %s58
      %p67 = scmp.eq.s32.totalorder %s24, 1
      %p68 = por %p66, %p67
      %p69 = scmp.ne.s32.totalorder %s58, %s59
      %p70 = scmp.eq.s32.totalorder %s24, 0
      %p71 = por %p69, %p70
      %p72 = scmp.ne.s32.totalorder %s58, %s59
      %p73 = scmp.eq.s32.totalorder %s25, 1
      %p74 = por %p72, %p73
      %p76 = scmp.ne.s32.totalorder %s59, %s75
      %p77 = scmp.eq.s32.totalorder %s25, 0
      %p78 = por %p76, %p77
      %s79 = ssub.s32 %s19, %s26
      %p80 = scmp.eq.s32.totalorder %s79, 0
      %s82 = sadd.s32 %s81, 1
      %s83 = scalar_select %p80, %s81, %s82
      %p86 = pneg %p80
      %p87 = scmp.eq.s32.totalorder %s19, 1
      %p88 = por %p86, %p87
      %p89 = scmp.ne.s32.totalorder %s81, %s84
      %p90 = scmp.eq.s32.totalorder %s19, 0
      %p91 = por %p89, %p90
      %p92 = scmp.ne.s32.totalorder %s81, %s84
      %p93 = scmp.eq.s32.totalorder %s24, 1
      %p94 = por %p92, %p93
      %p95 = scmp.ne.s32.totalorder %s84, %s85
      %p96 = scmp.eq.s32.totalorder %s24, 0
      %p97 = por %p95, %p96
      %p98 = scmp.ne.s32.totalorder %s84, %s85
      %p99 = scmp.eq.s32.totalorder %s25, 1
      %p100 = por %p98, %p99
      %p102 = scmp.ne.s32.totalorder %s85, %s101
      %p103 = scmp.eq.s32.totalorder %s25, 0
      %p104 = por %p102, %p103
      %s105 = ssub.s32 %s19, %s26
      %p106 = scmp.eq.s32.totalorder %s105, 0
      %s108 = sadd.s32 %s107, 1
      %s109 = scalar_select %p106, %s107, %s108
      %p112 = pneg %p106
      %p113 = scmp.eq.s32.totalorder %s19, 1
      %p114 = por %p112, %p113
      %p115 = scmp.ne.s32.totalorder %s107, %s110
      %p116 = scmp.eq.s32.totalorder %s19, 0
      %p117 = por %p115, %p116
      %p118 = scmp.ne.s32.totalorder %s107, %s110
      %p119 = scmp.eq.s32.totalorder %s24, 1
      %p120 = por %p118, %p119
      %p121 = scmp.ne.s32.totalorder %s110, %s111
      %p122 = scmp.eq.s32.totalorder %s24, 0
      %p123 = por %p121, %p122
      %p124 = scmp.ne.s32.totalorder %s110, %s111
      %p125 = scmp.eq.s32.totalorder %s25, 1
      %p126 = por %p124, %p125
      %p128 = scmp.ne.s32.totalorder %s111, %s127
      %p129 = scmp.eq.s32.totalorder %s25, 0
      %p130 = por %p128, %p129
      %p131 = scmp.le.s32.totalorder 1, %s19
      %p132 = scmp.lt.s32.totalorder %s19, 3
      %p133 = pnand %p131, %p132
      %p134 = pneg %p133
      // Predicated region
      $region9: #{tpu_custom_call.1} parent=5 // pred_check
        _
      $region10: #{tpu_custom_call.1} parent=5 // pred_check_branch
        %136 = sbr.rel (%p133) target = $region12
      $region11: #{tpu_custom_call.1} parent=5 // pred_region
        %s137 = ssub.s32 %s19, 1
      $region12: #{tpu_custom_call.1} parent=5 // pred_fallthru
        _
      %p138 = scmp.lt.s32.totalorder %s19, 2
      // Predicated region
      $region13: #{tpu_custom_call.1} parent=5 // pred_check
        %p139 = pneg %p138
      $region14: #{tpu_custom_call.1} parent=5 // pred_check_branch
        %141 = sbr.rel (%p139) target = $region16
      $region15: #{tpu_custom_call.1} parent=5 // pred_region
        // Predicated region
        $region17: #{tpu_custom_call.1} parent=15 // pred_check
          %p142 = pneg %p39
        $region18: #{tpu_custom_call.1} parent=15 // pred_check_branch
          %144 = sbr.rel (%p142) target = $region20
        $region19: #{tpu_custom_call.1} parent=15 // pred_region
          %s145 = sand.u32 %s29, 1
          %s146 = sand.u32 %s29, 1
          %s147 = smul.addr %s146, 16
          %s148 = scalar_lea.vmem [#allocation2], %s147
          %s149 = smul.addr %s19, 2
          %s150 = sadd.s32 1, %s149
          %s151 = smul.addr %s150, 8
          %s152 = scalar_lea.vmem %s0, %s151
          // Predicated region
          $region21: #{tpu_custom_call.1} parent=19 // pred_check
            _
          $region22: #{tpu_custom_call.1} parent=19 // pred_check_branch
            %154 = sbr.rel (0) target = $region24
          $region23: #{tpu_custom_call.1} parent=19 // pred_region
            // Predicated region
            $region25: #{tpu_custom_call.1} parent=23 // pred_check
              _
            $region26: #{tpu_custom_call.1} parent=23 // pred_check_branch
              %156 = sbr.rel (0) target = $region28
            $region27: #{tpu_custom_call.1} parent=23 // pred_region
              // Predicated region
              $region40: #{tpu_custom_call.1} parent=27 // pred_check
                _
              $region41: #{tpu_custom_call.1} parent=27 // pred_check_branch
                %174 = sbr.rel (0) target = $region43
              $region42: #{tpu_custom_call.1} parent=27 // pred_region
                loop: start=0, step=1, limit=1
                $region44: #{tpu_custom_call.1} parent=42 // loop_pre_header
                  _
                $region45: #{tpu_custom_call.1} parent=42 // loop_header
                  %s176 = sphi 0, %s180
                  %p177 = scmp.ge.s32.totalorder %s176, 1
                  %s181 = sphi %s152, %s152
                  %s182 = sphi %s148, %s148
                $region46: #{tpu_custom_call.1} parent=42 // loop_header_branch
                  %179 = sbr.rel (%p177) target = $region50
                $region47: #{tpu_custom_call.1} parent=42 // loop_body
                  %v183 = vld [vmem:[%s181] sm:$0xff]
                  %184 = vst [vmem:[%s182] sm:$0xff] %v183
                  %v185 = vld [vmem:[%s181 + $0x20] sm:$0xff]
                  %186 = vst [vmem:[%s182 + $0x8] sm:$0xff] %v185
                $region48: #{tpu_custom_call.1} parent=42 // loop_footer
                  %s180 = sadd.s32 1, %s176
                $region49: #{tpu_custom_call.1} parent=42 // loop_footer_branch
                  %175 = sbr.rel target = $region45
                $region50: #{tpu_custom_call.1} parent=42 // loop_exit
                  _
              $region43: #{tpu_custom_call.1} parent=27 // pred_fallthru
                _
              // Predicated region
              $region51: #{tpu_custom_call.1} parent=27 // pred_check
                _
              $region52: #{tpu_custom_call.1} parent=27 // pred_check_branch
                %188 = sbr.rel target = $region54
              $region53: #{tpu_custom_call.1} parent=27 // pred_region
                _
              $region54: #{tpu_custom_call.1} parent=27 // pred_fallthru
                _
            $region28: #{tpu_custom_call.1} parent=23 // pred_fallthru
              _
            // Predicated region
            $region29: #{tpu_custom_call.1} parent=23 // pred_check
              _
            $region30: #{tpu_custom_call.1} parent=23 // pred_check_branch
              %158 = sbr.rel target = $region32
            $region31: #{tpu_custom_call.1} parent=23 // pred_region
              %s160 = ssub.s32 256, 1
              loop: start=0, step=1, limit=1
              $region33: #{tpu_custom_call.1} parent=31 // loop_pre_header
                _
              $region34: #{tpu_custom_call.1} parent=31 // loop_header
                %s162 = sphi 0, %s166
                %p163 = scmp.ge.s32.totalorder %s162, 1
                %s167 = sphi %s152, %s152
                %s168 = sphi %s148, %s148
              $region35: #{tpu_custom_call.1} parent=31 // loop_header_branch
                %165 = sbr.rel (%p163) target = $region39
              $region36: #{tpu_custom_call.1} parent=31 // loop_body
                %v169 = vld [vmem:[%s167] sm:%s160]
                %170 = vst [vmem:[%s168] sm:%s160] %v169
                %v171 = vld [vmem:[%s167 + $0x20] sm:%s160]
                %172 = vst [vmem:[%s168 + $0x8] sm:%s160] %v171
              $region37: #{tpu_custom_call.1} parent=31 // loop_footer
                %s166 = sadd.s32 1, %s162
              $region38: #{tpu_custom_call.1} parent=31 // loop_footer_branch
                %161 = sbr.rel target = $region34
              $region39: #{tpu_custom_call.1} parent=31 // loop_exit
                _
            $region32: #{tpu_custom_call.1} parent=23 // pred_fallthru
              _
          $region24: #{tpu_custom_call.1} parent=19 // pred_fallthru
            _
          %189 = vnop
        $region20: #{tpu_custom_call.1} parent=15 // pred_fallthru
          _
        // Predicated region
        $region55: #{tpu_custom_call.1} parent=15 // pred_check
          %p190 = pneg %p65
        $region56: #{tpu_custom_call.1} parent=15 // pred_check_branch
          %192 = sbr.rel (%p190) target = $region58
        $region57: #{tpu_custom_call.1} parent=15 // pred_region
          %s193 = sand.u32 %s55, 1
          %s194 = scalar_lea.sflag [#allocation4], %s193
          %s195 = sand.u32 %s55, 1
          %s196 = smul.addr %s195, 16
          %s197 = scalar_lea.vmem [#allocation3], %s196
          %s199 = ssub.s32 256, 256
          %200 = vsyncadd %s194, %s199
          %s201 = smul.addr %s19, 2
          %s202 = smul.addr %s201, 128
          %s203 = scalar_lea.hbm %s1, %s202
          %s205 = sshll.u32 %s197, 4
          %s206 = int_to_ptr.vmem [resolvable:$true] %s205
          %208 = dma.hbm_to_vmem [thread:$0]  %s203, 256, %s206, %s194
        $region58: #{tpu_custom_call.1} parent=15 // pred_fallthru
          _
      $region16: #{tpu_custom_call.1} parent=5 // pred_fallthru
        _
      %p209 = scmp.le.s32.totalorder 1, %s19
      %p210 = scmp.lt.s32.totalorder %s19, 3
      %p211 = pnand %p209, %p210
      %p212 = pneg %p211
      // Predicated region
      $region59: #{tpu_custom_call.1} parent=5 // pred_check
        _
      $region60: #{tpu_custom_call.1} parent=5 // pred_check_branch
        %214 = sbr.rel (%p211) target = $region62
      $region61: #{tpu_custom_call.1} parent=5 // pred_region
        %s215 = ssub.s32 %s19, 1
        %s216 = sand.u32 %s32, 1
        %s217 = sand.u32 %s32, 1
        %s218 = smul.addr %s217, 16
        %s219 = scalar_lea.vmem [#allocation2], %s218
        // Predicated region
        $region63: #{tpu_custom_call.1} parent=61 // pred_check
          %p220 = pneg %p45
        $region64: #{tpu_custom_call.1} parent=61 // pred_check_branch
          %222 = sbr.rel (%p220) target = $region66
        $region65: #{tpu_custom_call.1} parent=61 // pred_region
          _
        $region66: #{tpu_custom_call.1} parent=61 // pred_fallthru
          _
        %s223 = sand.u32 %s58, 1
        %s224 = scalar_lea.sflag [#allocation4], %s223
        %s225 = sand.u32 %s58, 1
        %s226 = smul.addr %s225, 16
        %s227 = scalar_lea.vmem [#allocation3], %s226
        // Predicated region
        $region67: #{tpu_custom_call.1} parent=61 // pred_check
          %p228 = pneg %p71
        $region68: #{tpu_custom_call.1} parent=61 // pred_check_branch
          %230 = sbr.rel (%p228) target = $region70
        $region69: #{tpu_custom_call.1} parent=61 // pred_region
          %231 = dma.done %s224, 256
        $region70: #{tpu_custom_call.1} parent=61 // pred_fallthru
          _
        %s232 = sand.u32 %s32, 1
        %s233 = sand.u32 %s32, 1
        %s234 = smul.addr %s233, 16
        %s235 = scalar_lea.vmem [#allocation2], %s234
        %p236 = pneg %p45
        %p237 = pneg %p42
        %s238 = sand.u32 %s58, 1
        %s239 = scalar_lea.sflag [#allocation4], %s238
        %s240 = sand.u32 %s58, 1
        %s241 = smul.addr %s240, 16
        %s242 = scalar_lea.vmem [#allocation3], %s241
        %p243 = pneg %p71
        %p244 = pneg %p68
        %p245 = pneg %p97
        %p246 = pneg %p94
        %s247 = sand.u32 %s84, 1
        %s248 = scalar_lea.sflag [#allocation5], %s247
        %s249 = sand.u32 %s84, 1
        %s250 = smul.addr %s249, 8
        %s251 = scalar_lea.vmem [#allocation6], %s250
        %p252 = pneg %p123
        %p253 = pneg %p120
        %s254 = sand.u32 %s110, 1
        %s255 = scalar_lea.sflag [#allocation8], %s254
        %s256 = sand.u32 %s110, 1
        %s257 = smul.addr %s256, 16
        %s258 = scalar_lea.vmem [#allocation7], %s257
        %v259 = vld [vmem:[%s219] sm:$0xff]
        %v260 = vld [vmem:[%s219 + $0x8] sm:$0xff]
        %v261 = vmul.f32 %v259, 0.25
        %v262 = vmul.f32 %v260, 0.25
        %v263 = vld [vmem:[%s227] sm:$0xff]
        %v264 = vld [vmem:[%s227 + $0x8] sm:$0xff]
        %v265 = vadd.f32 %v263, %v261
        %267 = vrot.lane.b32.xlu0 %v262, 32
        %v268 = vpop.permute.xlu0 %267
        %v270 = vadd.f32 %v265, %v268
        %v271 = vadd.f32 %v264, %v268
        %vm272 = vcmask 261120
        %v273 = vsel %vm272, %v265, %v270
        %vm274 = vcmask 523264
        %275 = vst.msk [vmem:[%s251] sm:$0xff] %vm274, %v273
        %277 = vrot.lane.b32.xlu0 %v270, 64
        %v278 = vpop.permute.xlu0 %277
        %281 = vrot.lane.b32.xlu0 %v271, 64
        %v282 = vpop.permute.xlu0 %281
        %v284 = vsel %vm274, %v278, %v282
        %vm285 = vcmask 785408
        %v286 = vsel %vm285, %v284, 0.0
        %287 = vst [vmem:[%s258] sm:$0xff] %v286
        %288 = vst.msk [vmem:[%s258 + $0x8] sm:$0xff] %vm272, 0.0
        %s289 = sand.u32 %s84, 1
        %s290 = scalar_lea.sflag [#allocation5], %s289
        %s291 = sand.u32 %s84, 1
        %s292 = smul.addr %s291, 8
        %s293 = scalar_lea.vmem [#allocation6], %s292
        %s294 = sand.u32 %s110, 1
        %s295 = scalar_lea.sflag [#allocation8], %s294
        %s296 = sand.u32 %s110, 1
        %s297 = smul.addr %s296, 16
        %s298 = scalar_lea.vmem [#allocation7], %s297
        // Predicated region
        $region71: #{tpu_custom_call.1} parent=61 // pred_check
          %p299 = pneg %p94
        $region72: #{tpu_custom_call.1} parent=61 // pred_check_branch
          %301 = sbr.rel (%p299) target = $region74
        $region73: #{tpu_custom_call.1} parent=61 // pred_region
          %s303 = ssub.s32 128, 128
          %304 = vsyncadd %s290, %s303
          %s305 = smul.addr %s24, 128
          %s306 = scalar_lea.hbm %s2, %s305
          %s308 = sshll.u32 %s293, 4
          %s309 = int_to_ptr.vmem [resolvable:$true] %s308
          %311 = dma.vmem_to_hbm [thread:$0]  %s309, 128, %s306, %s290
        $region74: #{tpu_custom_call.1} parent=61 // pred_fallthru
          _
        // Predicated region
        $region75: #{tpu_custom_call.1} parent=61 // pred_check
          %p312 = pneg %p120
        $region76: #{tpu_custom_call.1} parent=61 // pred_check_branch
          %314 = sbr.rel (%p312) target = $region78
        $region77: #{tpu_custom_call.1} parent=61 // pred_region
          %s316 = ssub.s32 256, 256
          %317 = vsyncadd %s295, %s316
          %s318 = smul.addr %s24, 2
          %s319 = smul.addr %s318, 128
          %s320 = scalar_lea.hbm %s3, %s319
          %s322 = sshll.u32 %s298, 4
          %s323 = int_to_ptr.vmem [resolvable:$true] %s322
          %325 = dma.vmem_to_hbm [thread:$0]  %s323, 256, %s320, %s295
        $region78: #{tpu_custom_call.1} parent=61 // pred_fallthru
          _
      $region62: #{tpu_custom_call.1} parent=5 // pred_fallthru
        _
      %p326 = scmp.le.s32.totalorder 2, %s19
      // Predicated region
      $region79: #{tpu_custom_call.1} parent=5 // pred_check
        %p327 = pneg %p326
      $region80: #{tpu_custom_call.1} parent=5 // pred_check_branch
        %329 = sbr.rel (%p327) target = $region82
      $region81: #{tpu_custom_call.1} parent=5 // pred_region
        %s330 = ssub.s32 %s19, 2
        // Predicated region
        $region83: #{tpu_custom_call.1} parent=81 // pred_check
          %p331 = pneg %p100
        $region84: #{tpu_custom_call.1} parent=81 // pred_check_branch
          %333 = sbr.rel (%p331) target = $region86
        $region85: #{tpu_custom_call.1} parent=81 // pred_region
          %s334 = sand.u32 %s85, 1
          %s335 = scalar_lea.sflag [#allocation5], %s334
          %s336 = sand.u32 %s85, 1
          %s337 = smul.addr %s336, 8
          %s338 = scalar_lea.vmem [#allocation6], %s337
          %339 = dma.done %s335, 128
        $region86: #{tpu_custom_call.1} parent=81 // pred_fallthru
          _
        // Predicated region
        $region87: #{tpu_custom_call.1} parent=81 // pred_check
          %p340 = pneg %p126
        $region88: #{tpu_custom_call.1} parent=81 // pred_check_branch
          %342 = sbr.rel (%p340) target = $region90
        $region89: #{tpu_custom_call.1} parent=81 // pred_region
          %s343 = sand.u32 %s111, 1
          %s344 = scalar_lea.sflag [#allocation8], %s343
          %s345 = sand.u32 %s111, 1
          %s346 = smul.addr %s345, 16
          %s347 = scalar_lea.vmem [#allocation7], %s346
          %348 = dma.done %s344, 256
        $region90: #{tpu_custom_call.1} parent=81 // pred_fallthru
          _
      $region82: #{tpu_custom_call.1} parent=5 // pred_fallthru
        _
    $region6: #{tpu_custom_call.1} parent=1 // loop_footer
      %s23 = sadd.s32 1, %s19
    $region7: #{tpu_custom_call.1} parent=1 // loop_footer_branch
      %18 = sbr.rel target = $region3
    $region8: #{tpu_custom_call.1} parent=1 // loop_exit
      _
    %349 = vsyncpa [#allocation4], 1
    %s350 = scalar_lea.sflag [#allocation4], 1
    %351 = vsyncpa %s350, 1
    %352 = vsyncpa [#allocation5], 1
    %s353 = scalar_lea.sflag [#allocation5], 1
    %354 = vsyncpa %s353, 1
    %355 = vsyncpa [#allocation8], 1
    %s356 = scalar_lea.sflag [#allocation8], 1
    %357 = vsyncpa %s356, 1

</llo_original>
